<compile_context>
chip_gen: v5e
topology: v5e:2x2
jax: 0.10.0
libtpu: 0.0.40
codegen_flags: <defaults>
</compile_context>

<pallas_src>
import functools

import jax
import jax.numpy as jnp
import numpy as np
from jax.experimental import pallas as pl
from jax.experimental.pallas import tpu as pltpu


# ----------------------------------------------------------------------------
# Tiling helpers.
#
# Forward blocks are capped at ~4 MiB: big enough that the ~0.35 us per-grid-
# step overhead is fully amortized (>85% of HBM roofline per the measured tile
# sweep), small enough that input + double-buffered output (4 blocks in flight)
# stays under the 32 MiB scoped-VMEM limit on every generation (v5e/v6e/v7x).
# ----------------------------------------------------------------------------
_BLOCK_BUDGET_BYTES = 4 << 20


def _pick_f_tile(F, B, itemsize, budget_bytes=_BLOCK_BUDGET_BYTES):
    """Largest lane-dense (multiple of 128) tile of the feature axis that
    divides F and keeps a (B, tile) block within the byte budget."""
    if F % 128 != 0:
        return F                                   # full-extent block is always legal
    max_tile = (budget_bytes // max(1, B * itemsize)) // 128 * 128
    tile = min(F, max(128, max_tile))
    while F % tile != 0:                           # shrink to a divisor of F
        tile -= 128
    return tile


def _pick_group_tile(batch, ntrials, nclass, itemsize,
                     budget_bytes=_BLOCK_BUDGET_BYTES):
    """Groups (of ntrials rows each) per block for the loss kernel."""
    per_group = max(1, ntrials * nclass * itemsize)
    g = min(batch, max(1, budget_bytes // per_group))
    while batch % g != 0:
        g -= 1
    return g


# ----------------------------------------------------------------------------
# Forward: apply augmentation ntrials times and concatenate along batch dim.
# Grid = (F tiles, ntrials) with the trial axis innermost: x's block index is
# constant over trials, so each x tile is DMA'd from HBM once (Pallas skips the
# re-fetch when the block index does not change) while the ntrials output tiles
# are streamed out.  The kernel is HBM-write bound, which is the floor for an
# op whose contract is "materialize ntrials augmented copies".
# ----------------------------------------------------------------------------
def _augment_kernel(scale_ref, shift_ref, x_ref, out_ref):
    # scale_ref / shift_ref: SMEM (ntrials,) f32 ; x_ref/out_ref: VMEM (B, TILE_F)
    t = pl.program_id(1)
    out_ref[...] = (x_ref[...] * scale_ref[t] + shift_ref[t]).astype(out_ref.dtype)


def maxup_forward(x, y, scale, shift, ntrials):
    """Pallas version of Maxup.forward.  x: (B,C,H,W), y: (B,) int32."""
    B, C, H, W = x.shape
    F = C * H * W
    x2d = x.reshape(B, F)
    tf = _pick_f_tile(F, B, x.dtype.itemsize)

    out = pl.pallas_call(
        _augment_kernel,
        out_shape=jax.ShapeDtypeStruct((ntrials, B, F), x.dtype),
        grid=(F // tf, ntrials),
        in_specs=[
            pl.BlockSpec(memory_space=pltpu.MemorySpace.SMEM),      # scale
            pl.BlockSpec(memory_space=pltpu.MemorySpace.SMEM),      # shift
            pl.BlockSpec((B, tf), lambda f, t: (0, f)),             # x tile, const over t
        ],
        out_specs=pl.BlockSpec((None, B, tf), lambda f, t: (t, 0, f)),
        compiler_params=pltpu.CompilerParams(
            dimension_semantics=("parallel", "arbitrary"),
            vmem_limit_bytes=32 * 1024 * 1024),
    )(scale, shift, x2d)

    additional_x = out.reshape(ntrials * B, C, H, W)     # torch.cat(dim=0) order
    additional_labels = jnp.tile(y, ntrials)             # labels unchanged per trial
    return additional_x, additional_labels


# ----------------------------------------------------------------------------
# maxup_loss: per-sample cross entropy -> view(batch, ntrials) -> max over
# trials -> mean; plus accuracy count / ntrials.
#
# The (batch, ntrials, C) reshape is done in the wrapper (free on contiguous
# data), so inside the kernel the group max is a cheap axis=1 reduce.  Rows are
# tiled over a grid with the scalar sums accumulated in the resident (1,1)
# output blocks (init at step 0, normalize at the last step), so arbitrarily
# large logits never have to fit in VMEM at once.
# ----------------------------------------------------------------------------
def _maxup_loss_kernel(logits_ref, labels_ref, loss_ref, correct_ref,
                       *, ntrials, batch):
    pid = pl.program_id(0)

    @pl.when(pid == 0)
    def _init():
        loss_ref[...] = jnp.zeros_like(loss_ref)
        correct_ref[...] = jnp.zeros_like(correct_ref)

    logits = logits_ref[...].astype(jnp.float32)            # (G, T, C)
    labels = labels_ref[...]                                 # (G, T, 1) int32
    G, T, C = logits.shape

    class_ids = jax.lax.broadcasted_iota(jnp.int32, (G, T, C), 2)
    onehot = class_ids == labels                             # (G, T, C)

    # cross entropy (reduction='none'):  logsumexp(logits) - logits[label]
    row_max = jnp.max(logits, axis=-1, keepdims=True)                    # (G,T,1)
    lse = row_max + jnp.log(jnp.sum(jnp.exp(logits - row_max),
                                    axis=-1, keepdims=True))             # (G,T,1)
    true_logit = jnp.sum(jnp.where(onehot, logits, 0.0),
                         axis=-1, keepdims=True)                         # (G,T,1)
    per_sample = lse - true_logit                                        # (G,T,1)

    # stacked_loss.view(batch, ntrials, -1).max(dim=1)[0]  ->  sum accumulated
    group_max = jnp.max(per_sample, axis=1, keepdims=True)               # (G,1,1)
    loss_ref[...] += jnp.sum(group_max, axis=0, keepdims=True)[0]        # (1,1)

    # argmax (first-max tie break) accuracy count
    is_max = logits == row_max
    pred = jnp.min(jnp.where(is_max, class_ids, C),
                   axis=-1, keepdims=True)                               # (G,T,1)
    hit = (pred == labels).astype(jnp.float32)                           # (G,T,1)
    correct_ref[...] += jnp.sum(hit, axis=(0, 1), keepdims=True)[0]      # (1,1)

    @pl.when(pid == pl.num_programs(0) - 1)
    def _finalize():
        loss_ref[...] = loss_ref[...] / float(batch)        # mean over groups
        correct_ref[...] = correct_ref[...] / float(ntrials)


def maxup_loss(outputs, extra_labels, ntrials):
    """Pallas version of Maxup.maxup_loss.  outputs: (ntrials*B, nclass)."""
    N, C = outputs.shape
    assert N % ntrials == 0, "number of rows must be a multiple of ntrials"
    batch = N // ntrials

    # Matches PyTorch's .view(batch, ntrials, -1) on the trial-major concat
    # (same grouping quirk as the original module / the JAX reference).
    logits3 = outputs.reshape(batch, ntrials, C)            # native dtype, no copy/cast
    labels3 = extra_labels.astype(jnp.int32).reshape(batch, ntrials, 1)

    gpb = _pick_group_tile(batch, ntrials, C, outputs.dtype.itemsize)

    kernel = functools.partial(_maxup_loss_kernel, ntrials=ntrials, batch=batch)
    loss, correct = pl.pallas_call(
        kernel,
        out_shape=(jax.ShapeDtypeStruct((1, 1), jnp.float32),
                   jax.ShapeDtypeStruct((1, 1), jnp.float32)),
        grid=(batch // gpb,),
        in_specs=[
            pl.BlockSpec((gpb, ntrials, C), lambda i: (i, 0, 0)),
            pl.BlockSpec((gpb, ntrials, 1), lambda i: (i, 0, 0)),
        ],
        out_specs=(pl.BlockSpec((1, 1), lambda i: (0, 0)),
                   pl.BlockSpec((1, 1), lambda i: (0, 0))),
        compiler_params=pltpu.CompilerParams(
            dimension_semantics=("arbitrary",),
            vmem_limit_bytes=32 * 1024 * 1024),
    )(logits3, labels3)
    return loss[0, 0], correct[0, 0]


# ----------------------------------------------------------------------------
# Pure-JAX references (for a silent correctness assert).
# ----------------------------------------------------------------------------
def _ref_forward(x, y, scale, shift, ntrials):
    xs = jnp.concatenate([x * scale[t] + shift[t] for t in range(ntrials)], axis=0)
    ys = jnp.tile(y, ntrials)
    return xs, ys


def _ref_maxup_loss(logits, labels, ntrials):
    bs = logits.shape[0] // ntrials
    ce = jax.nn.logsumexp(logits, axis=-1) - jnp.take_along_axis(
        logits, labels[:, None], axis=-1)[:, 0]
    loss = jnp.mean(jnp.max(ce.reshape(bs, ntrials), axis=1))
    correct = jnp.sum(jnp.argmax(logits, axis=1) == labels).astype(jnp.float32) / ntrials
    return loss, correct


if __name__ == "__main__":
    key = jax.random.PRNGKey(0)
    k_x, k_y, k_w, k_b = jax.random.split(key, 4)

    B, C, H, W = 2, 4, 16, 16
    NTRIALS = 4
    NCLASS = 10

    x = jax.random.normal(k_x, (B, C, H, W), dtype=jnp.float32)
    y = jax.random.randint(k_y, (B,), 0, NCLASS, dtype=jnp.int32)

    # deterministic per-trial augmentation parameters
    scale = 1.0 + 0.1 * jnp.arange(NTRIALS, dtype=jnp.float32)
    shift = 0.05 * jnp.arange(NTRIALS, dtype=jnp.float32)

    # ---- forward (Pallas) ----
    add_x, add_y = maxup_forward(x, y, scale, shift, NTRIALS)
    add_x, add_y = jax.block_until_ready((add_x, add_y))

    ref_x, ref_y = _ref_forward(x, y, scale, shift, NTRIALS)
    assert add_x.shape == (NTRIALS * B, C, H, W)
    assert np.allclose(np.asarray(add_x), np.asarray(ref_x), atol=1e-5)
    assert np.array_equal(np.asarray(add_y), np.asarray(ref_y))

    # ---- tiny deterministic "classifier" (glue, plain JAX) ----
    Wt = 0.02 * jax.random.normal(k_w, (C * H * W, NCLASS), dtype=jnp.float32)
    bt = 0.01 * jax.random.normal(k_b, (NCLASS,), dtype=jnp.float32)
    logits = add_x.reshape(NTRIALS * B, -1) @ Wt + bt

    # ---- maxup_loss (Pallas) ----
    loss, correct = maxup_loss(logits, add_y, NTRIALS)
    loss, correct = jax.block_until_ready((loss, correct))

    ref_loss, ref_correct = _ref_maxup_loss(logits, add_y, NTRIALS)
    assert np.allclose(float(loss), float(ref_loss), atol=1e-5, rtol=1e-5)
    assert np.allclose(float(correct), float(ref_correct), atol=1e-6)

    print("KERNEL_OK")
</pallas_src>

<mosaic_0001>
module attributes {stable_mosaic.version = 11 : i64} {
  func.func @_augment_kernel(%arg0: i32, %arg1: i32, %arg2: memref<4xf32, #tpu.memory_space<smem>>, %arg3: memref<4xf32, #tpu.memory_space<smem>>, %arg4: memref<2x1024xf32, #tpu.memory_space<vmem>>, %arg5: memref<1x2x1024xf32, #tpu.memory_space<vmem>>) attributes {dimension_semantics = [#tpu.dimension_semantics<parallel>, #tpu.dimension_semantics<arbitrary>], iteration_bounds = array<i64: 1, 4>, scalar_prefetch = 0 : i64, scratch_operands = 0 : i64, tpu.core_type = #tpu.core_type<tc>, window_params = [{transform_indices = @transform_0, window_bounds = array<i64: 4>}, {transform_indices = @transform_1, window_bounds = array<i64: 4>}, {transform_indices = @transform_2, window_bounds = array<i64: 2, 1024>}, {transform_indices = @transform_3, window_bounds = array<i64: 1, 2, 1024>}]} {
    %c0 = arith.constant 0 : index
    %c0_0 = arith.constant 0 : index
    %0 = vector.load %arg4[%c0, %c0_0] : memref<2x1024xf32, #tpu.memory_space<vmem>>, vector<2x1024xf32>
    %1 = arith.index_cast %arg1 : i32 to index
    %2 = memref.load %arg2[%1] : memref<4xf32, #tpu.memory_space<smem>>
    %3 = vector.broadcast %2 : f32 to vector<2x1024xf32>
    %4 = arith.mulf %0, %3 : vector<2x1024xf32>
    %5 = arith.index_cast %arg1 : i32 to index
    %6 = memref.load %arg3[%5] : memref<4xf32, #tpu.memory_space<smem>>
    %7 = vector.broadcast %6 : f32 to vector<2x1024xf32>
    %8 = arith.addf %4, %7 : vector<2x1024xf32>
    %c0_1 = arith.constant 0 : index
    %c0_2 = arith.constant 0 : index
    %c0_3 = arith.constant 0 : index
    %9 = vector.load %arg5[%c0_1, %c0_2, %c0_3] : memref<1x2x1024xf32, #tpu.memory_space<vmem>>, vector<1x2x1024xf32>
    %10 = vector.shape_cast %9 : vector<1x2x1024xf32> to vector<2x1024xf32>
    %11 = vector.shape_cast %8 : vector<2x1024xf32> to vector<1x2x1024xf32>
    tpu.vector_store %arg5[%c0_1, %c0_2, %c0_3], %11 {strides = array<i32>} : memref<1x2x1024xf32, #tpu.memory_space<vmem>>, vector<1x2x1024xf32>,
    return
  }
  func.func @transform_0(%arg0: i32, %arg1: i32) -> i32 {
    %c0_i32 = arith.constant 0 : i32
    %c0_i32_0 = arith.constant 0 : i32
    return %c0_i32 : i32
  }
  func.func @transform_1(%arg0: i32, %arg1: i32) -> i32 {
    %c0_i32 = arith.constant 0 : i32
    %c0_i32_0 = arith.constant 0 : i32
    return %c0_i32 : i32
  }
  func.func @transform_2(%arg0: i32, %arg1: i32) -> (i32, i32) {
    %c0_i32 = arith.constant 0 : i32
    %c0_i32_0 = arith.constant 0 : i32
    return %c0_i32, %arg0 : i32, i32
  }
  func.func @transform_3(%arg0: i32, %arg1: i32) -> (i32, i32, i32) {
    %c0_i32 = arith.constant 0 : i32
    %c0_i32_0 = arith.constant 0 : i32
    return %arg1, %c0_i32, %arg0 : i32, i32, i32
  }
}

</mosaic_0001>

<llo_original>
// kernel: tpu_custom_call.1
$region0: #{tpu_custom_call.1}
  #allocation0 [shape = 'u32[]', space=smem, size = 0x4, offset = 0x4, fixed_abs, tag = 'smem constant byte address 0x4 - core index']
  #allocation1 [shape = 'u32[72,128]{1,0:T(1,128)}', space=vmem, size = 0x9000, scoped, tag = 'internal scratch']
  %s0 = inlined_call_operand.hbm [shape: f32[4], index: 0, kind: input, shape index: {}]
  %s1 = inlined_call_operand.hbm [shape: f32[4], index: 1, kind: input, shape index: {}]
  %s2 = inlined_call_operand.hbm [shape: f32[2,1024], index: 2, kind: input, shape index: {}]
  %s3 = inlined_call_operand.hbm [shape: f32[4,2,1024], index: 3, kind: output, shape index: {}]
  %s4 = sld [smem:[#allocation0]]
  $region57: #{tpu_custom_call.1} parent=0
    _
  %s6 = ssub.s32 1, %s4
  %s7 = scalar_select 0, %s6, %s4
  $region1: #{tpu_custom_call.1} parent=0
    #allocation2 [shape = 'u8[512]{0}', space=smem, size = 0x200, scoped, tag = 'input window, operand 0, single buffered']
    #allocation3 [shape = 's32[2]{0}', space=sflag, size = 0x8, scoped, tag = 'scoped memory for tpu_custom_call.1']
    #allocation4 [shape = 's32[2]{0}', space=sflag, size = 0x8, scoped, tag = 'scoped memory for tpu_custom_call.1']
    #allocation5 [shape = 's32[2]{0}', space=sflag, size = 0x8, scoped, tag = 'scoped memory for tpu_custom_call.1']
    #allocation6 [shape = 'u8[512]{0}', space=smem, size = 0x200, scoped, tag = 'input window, operand 1, single buffered']
    #allocation7 [shape = 's32[1]{0}', space=sflag, size = 0x4, scoped, tag = 'scoped memory for tpu_custom_call.1']
    #allocation8 [shape = 'u8[8192]{0}', space=vmem, size = 0x2000, scoped, tag = 'input window, operand 2, single buffered']
    #allocation9 [shape = 'u8[16384]{0}', space=vmem, size = 0x4000, scoped, tag = 'output window, operand 0']
    %8 = vsyncpa [#allocation5], 0
    %9 = vsyncpa [#allocation7], 0
    %10 = vsyncpa [#allocation3], 0
    %11 = vsyncpa [#allocation4], 0
    %s12 = scalar_lea.sflag [#allocation4], 1
    %13 = vsyncpa %s12, 0
    loop: start=0, step=1, limit=6
    $region2: #{tpu_custom_call.1} parent=1 // loop_pre_header
      _
    $region3: #{tpu_custom_call.1} parent=1 // loop_header
      %s15 = sphi 0, %s19
      %p16 = scmp.ge.s32.totalorder %s15, 6
      %s22 = sphi 0, %s34
      %s23 = sphi 0, %s30
      %s24 = sphi 0, %s22
      %s25 = sphi 0, %s23
      %s26 = sphi 0, %s24
      %s27 = sphi 0, %s25
      %s35 = sphi 0, %s35
      %s37 = sphi 0, %s35
      %s38 = sphi 0, %s37
      %s52 = sphi 0, %s38
      %s56 = sphi 0, %s56
      %s58 = sphi 0, %s56
      %s59 = sphi 0, %s58
      %s73 = sphi 0, %s59
      %s79 = sphi 0, %s81
      %s82 = sphi 0, %s79
      %s83 = sphi 0, %s82
      %s99 = sphi 0, %s83
      %s107 = sphi 0, %s109
      %s110 = sphi 0, %s107
      %s111 = sphi 0, %s110
      %s127 = sphi 0, %s111
    $region4: #{tpu_custom_call.1} parent=1 // loop_header_branch
      %18 = sbr.rel (%p16) target = $region8
    $region5: #{tpu_custom_call.1} parent=1 // loop_body
      %s20 = ssub.s32 %s15, 1
      %s21 = ssub.s32 %s15, 2
      %s28 = sadd.s32 1, %s23
      %p29 = scmp.ge.s32.totalorder %s28, 4
      %s30 = scalar_select %p29, 0, %s28
      %s31 = sadd.s32 1, %s22
      %s32 = scalar_select %p29, %s31, %s22
      %p33 = scmp.ge.s32.totalorder %s32, 1
      %s34 = scalar_select %p33, 0, %s32
      %s36 = sadd.s32 %s35, 1
      %p39 = scmp.eq.s32.totalorder %s15, 3
      %p40 = scmp.ne.s32.totalorder %s35, %s37
      %p41 = scmp.eq.s32.totalorder %s15, 0
      %p42 = por %p40, %p41
      %p43 = scmp.ne.s32.totalorder %s35, %s37
      %p44 = scmp.eq.s32.totalorder %s20, 3
      %p45 = por %p43, %p44
      %p46 = scmp.ne.s32.totalorder %s37, %s38
      %p47 = scmp.eq.s32.totalorder %s20, 0
      %p48 = por %p46, %p47
      %p49 = scmp.ne.s32.totalorder %s37, %s38
      %p50 = scmp.eq.s32.totalorder %s21, 3
      %p51 = por %p49, %p50
      %p53 = scmp.ne.s32.totalorder %s38, %s52
      %p54 = scmp.eq.s32.totalorder %s21, 0
      %p55 = por %p53, %p54
      %s57 = sadd.s32 %s56, 1
      %p60 = scmp.eq.s32.totalorder %s15, 3
      %p61 = scmp.ne.s32.totalorder %s56, %s58
      %p62 = scmp.eq.s32.totalorder %s15, 0
      %p63 = por %p61, %p62
      %p64 = scmp.ne.s32.totalorder %s56, %s58
      %p65 = scmp.eq.s32.totalorder %s20, 3
      %p66 = por %p64, %p65
      %p67 = scmp.ne.s32.totalorder %s58, %s59
      %p68 = scmp.eq.s32.totalorder %s20, 0
      %p69 = por %p67, %p68
      %p70 = scmp.ne.s32.totalorder %s58, %s59
      %p71 = scmp.eq.s32.totalorder %s21, 3
      %p72 = por %p70, %p71
      %p74 = scmp.ne.s32.totalorder %s59, %s73
      %p75 = scmp.eq.s32.totalorder %s21, 0
      %p76 = por %p74, %p75
      %s77 = ssub.s32 %s22, %s34
      %p78 = scmp.eq.s32.totalorder %s77, 0
      %s80 = sadd.s32 %s79, 1
      %s81 = scalar_select %p78, %s79, %s80
      %p84 = pneg %p78
      %p85 = scmp.eq.s32.totalorder %s15, 3
      %p86 = por %p84, %p85
      %p87 = scmp.ne.s32.totalorder %s79, %s82
      %p88 = scmp.eq.s32.totalorder %s15, 0
      %p89 = por %p87, %p88
      %p90 = scmp.ne.s32.totalorder %s79, %s82
      %p91 = scmp.eq.s32.totalorder %s20, 3
      %p92 = por %p90, %p91
      %p93 = scmp.ne.s32.totalorder %s82, %s83
      %p94 = scmp.eq.s32.totalorder %s20, 0
      %p95 = por %p93, %p94
      %p96 = scmp.ne.s32.totalorder %s82, %s83
      %p97 = scmp.eq.s32.totalorder %s21, 3
      %p98 = por %p96, %p97
      %p100 = scmp.ne.s32.totalorder %s83, %s99
      %p101 = scmp.eq.s32.totalorder %s21, 0
      %p102 = por %p100, %p101
      %s103 = ssub.s32 %s23, %s30
      %s104 = ssub.s32 %s22, %s34
      %s105 = sor.u32 %s103, %s104
      %p106 = scmp.eq.s32.totalorder %s105, 0
      %s108 = sadd.s32 %s107, 1
      %s109 = scalar_select %p106, %s107, %s108
      %p112 = pneg %p106
      %p113 = scmp.eq.s32.totalorder %s15, 3
      %p114 = por %p112, %p113
      %p115 = scmp.ne.s32.totalorder %s107, %s110
      %p116 = scmp.eq.s32.totalorder %s15, 0
      %p117 = por %p115, %p116
      %p118 = scmp.ne.s32.totalorder %s107, %s110
      %p119 = scmp.eq.s32.totalorder %s20, 3
      %p120 = por %p118, %p119
      %p121 = scmp.ne.s32.totalorder %s110, %s111
      %p122 = scmp.eq.s32.totalorder %s20, 0
      %p123 = por %p121, %p122
      %p124 = scmp.ne.s32.totalorder %s110, %s111
      %p125 = scmp.eq.s32.totalorder %s21, 3
      %p126 = por %p124, %p125
      %p128 = scmp.ne.s32.totalorder %s111, %s127
      %p129 = scmp.eq.s32.totalorder %s21, 0
      %p130 = por %p128, %p129
      %p131 = scmp.le.s32.totalorder 1, %s15
      %p132 = scmp.lt.s32.totalorder %s15, 5
      %p133 = pnand %p131, %p132
      %p134 = pneg %p133
      // Predicated region
      $region9: #{tpu_custom_call.1} parent=5 // pred_check
        _
      $region10: #{tpu_custom_call.1} parent=5 // pred_check_branch
        %136 = sbr.rel (%p133) target = $region12
      $region11: #{tpu_custom_call.1} parent=5 // pred_region
        %s137 = ssub.s32 %s15, 1
        // Predicated region
        $region13: #{tpu_custom_call.1} parent=11 // pred_check
          %p138 = pneg %p48
        $region14: #{tpu_custom_call.1} parent=11 // pred_check_branch
          %140 = sbr.rel (%p138) target = $region16
        $region15: #{tpu_custom_call.1} parent=11 // pred_region
          %142 = vsyncadd [#allocation5], 0
          %s144 = sshll.u32 %s0, 4
          %s145 = int_to_ptr.hbm [resolvable:$true] %s144
          %147 = dma.hbm_to_smem %s145, 16, [#allocation2], [#allocation5]
        $region16: #{tpu_custom_call.1} parent=11 // pred_fallthru
          _
        // Predicated region
        $region17: #{tpu_custom_call.1} parent=11 // pred_check
          %p148 = pneg %p69
        $region18: #{tpu_custom_call.1} parent=11 // pred_check_branch
          %150 = sbr.rel (%p148) target = $region20
        $region19: #{tpu_custom_call.1} parent=11 // pred_region
          %152 = vsyncadd [#allocation7], 0
          %s154 = sshll.u32 %s1, 4
          %s155 = int_to_ptr.hbm [resolvable:$true] %s154
          %157 = dma.hbm_to_smem %s155, 16, [#allocation6], [#allocation7]
        $region20: #{tpu_custom_call.1} parent=11 // pred_fallthru
          _
        // Predicated region
        $region21: #{tpu_custom_call.1} parent=11 // pred_check
          %p158 = pneg %p95
        $region22: #{tpu_custom_call.1} parent=11 // pred_check_branch
          %160 = sbr.rel (%p158) target = $region24
        $region23: #{tpu_custom_call.1} parent=11 // pred_region
          %s161 = smul.u32 8, %s24
          %163 = vsyncadd [#allocation3], 0
          %s164 = smul.addr %s161, 2
          %s165 = scalar_lea.hbm %s2, %s164
          %s167 = sshll.u32 %s165, 4
          %s168 = int_to_ptr.hbm [resolvable:$true] %s167
          %s169 = sshll.u32 [#allocation8], 4
          %s170 = int_to_ptr.vmem [resolvable:$true] %s169
          %172 = dma.hbm_to_vmem [thread:$0]  %s168, 256, %s170, [#allocation3]
        $region24: #{tpu_custom_call.1} parent=11 // pred_fallthru
          _
      $region12: #{tpu_custom_call.1} parent=5 // pred_fallthru
        _
      %p173 = scmp.lt.s32.totalorder %s15, 4
      // Predicated region
      $region25: #{tpu_custom_call.1} parent=5 // pred_check
        %p174 = pneg %p173
      $region26: #{tpu_custom_call.1} parent=5 // pred_check_branch
        %176 = sbr.rel (%p174) target = $region28
      $region27: #{tpu_custom_call.1} parent=5 // pred_region
        _
      $region28: #{tpu_custom_call.1} parent=5 // pred_fallthru
        _
      %p177 = scmp.le.s32.totalorder 1, %s15
      %p178 = scmp.lt.s32.totalorder %s15, 5
      %p179 = pnand %p177, %p178
      %p180 = pneg %p179
      // Predicated region
      $region29: #{tpu_custom_call.1} parent=5 // pred_check
        _
      $region30: #{tpu_custom_call.1} parent=5 // pred_check_branch
        %182 = sbr.rel (%p179) target = $region32
      $region31: #{tpu_custom_call.1} parent=5 // pred_region
        %s183 = ssub.s32 %s15, 1
        // Predicated region
        $region33: #{tpu_custom_call.1} parent=31 // pred_check
          %p184 = pneg %p48
        $region34: #{tpu_custom_call.1} parent=31 // pred_check_branch
          %186 = sbr.rel (%p184) target = $region36
        $region35: #{tpu_custom_call.1} parent=31 // pred_region
          %188 = dma.done [#allocation5], 16
        $region36: #{tpu_custom_call.1} parent=31 // pred_fallthru
          _
        // Predicated region
        $region37: #{tpu_custom_call.1} parent=31 // pred_check
          %p189 = pneg %p69
        $region38: #{tpu_custom_call.1} parent=31 // pred_check_branch
          %191 = sbr.rel (%p189) target = $region40
        $region39: #{tpu_custom_call.1} parent=31 // pred_region
          %193 = dma.done [#allocation7], 16
        $region40: #{tpu_custom_call.1} parent=31 // pred_fallthru
          _
        // Predicated region
        $region41: #{tpu_custom_call.1} parent=31 // pred_check
          %p194 = pneg %p95
        $region42: #{tpu_custom_call.1} parent=31 // pred_check_branch
          %196 = sbr.rel (%p194) target = $region44
        $region43: #{tpu_custom_call.1} parent=31 // pred_region
          %198 = dma.done [#allocation3], 256
        $region44: #{tpu_custom_call.1} parent=31 // pred_fallthru
          _
        %199 = sfence
        %p200 = pneg %p48
        %p201 = pneg %p45
        %p202 = pneg %p69
        %p203 = pneg %p66
        %p204 = pneg %p95
        %p205 = pneg %p92
        %p206 = pneg %p123
        %p207 = pneg %p120
        %s208 = sand.u32 %s110, 1
        %s209 = scalar_lea.sflag [#allocation4], %s208
        %s210 = sand.u32 %s110, 1
        %s211 = smul.addr %s210, 16
        %s212 = scalar_lea.vmem [#allocation9], %s211
        %s213 = smul.u32 8, %s24
        %s214 = smul.u32 8, %s24
        %v215 = vld [vmem:[#allocation8] sm:$0xff]
        %v216 = vld [vmem:[#allocation8 + $0x8] sm:$0xff]
        %s217 = sld [smem:[#allocation2 + %s25]]
        %v218 = vstv %s217
        %v219 = vmul.f32 %v215, %v218
        %v220 = vmul.f32 %v216, %v218
        %s221 = sld [smem:[#allocation6 + %s25]]
        %v222 = vstv %s221
        %v223 = vadd.f32 %v219, %v222
        %v224 = vadd.f32 %v220, %v222
        %225 = vst [vmem:[%s212] sm:$0xff] %v223
        %226 = vst [vmem:[%s212 + $0x8] sm:$0xff] %v224
        %s227 = sand.u32 %s110, 1
        %s228 = scalar_lea.sflag [#allocation4], %s227
        %s229 = sand.u32 %s110, 1
        %s230 = smul.addr %s229, 16
        %s231 = scalar_lea.vmem [#allocation9], %s230
        // Predicated region
        $region45: #{tpu_custom_call.1} parent=31 // pred_check
          %p232 = pneg %p120
        $region46: #{tpu_custom_call.1} parent=31 // pred_check_branch
          %234 = sbr.rel (%p232) target = $region48
        $region47: #{tpu_custom_call.1} parent=31 // pred_region
          %s235 = smul.u32 8, %s24
          %237 = vsyncadd %s228, 0
          %s238 = smul.addr %s25, 8
          %s239 = sadd.s32 %s235, %s238
          %s240 = smul.addr %s239, 2
          %s241 = scalar_lea.hbm %s3, %s240
          %s243 = sshll.u32 %s231, 4
          %s244 = int_to_ptr.vmem [resolvable:$true] %s243
          %s245 = sshll.u32 %s241, 4
          %s246 = int_to_ptr.hbm [resolvable:$true] %s245
          %248 = dma.vmem_to_hbm [thread:$0]  %s244, 256, %s246, %s228
        $region48: #{tpu_custom_call.1} parent=31 // pred_fallthru
          _
      $region32: #{tpu_custom_call.1} parent=5 // pred_fallthru
        _
      %p249 = scmp.le.s32.totalorder 2, %s15
      // Predicated region
      $region49: #{tpu_custom_call.1} parent=5 // pred_check
        %p250 = pneg %p249
      $region50: #{tpu_custom_call.1} parent=5 // pred_check_branch
        %252 = sbr.rel (%p250) target = $region52
      $region51: #{tpu_custom_call.1} parent=5 // pred_region
        %s253 = ssub.s32 %s15, 2
        // Predicated region
        $region53: #{tpu_custom_call.1} parent=51 // pred_check
          %p254 = pneg %p126
        $region54: #{tpu_custom_call.1} parent=51 // pred_check_branch
          %256 = sbr.rel (%p254) target = $region56
        $region55: #{tpu_custom_call.1} parent=51 // pred_region
          %s257 = sand.u32 %s111, 1
          %s258 = scalar_lea.sflag [#allocation4], %s257
          %s259 = sand.u32 %s111, 1
          %s260 = smul.addr %s259, 16
          %s261 = scalar_lea.vmem [#allocation9], %s260
          %263 = dma.done %s258, 256
        $region56: #{tpu_custom_call.1} parent=51 // pred_fallthru
          _
      $region52: #{tpu_custom_call.1} parent=5 // pred_fallthru
        _
    $region6: #{tpu_custom_call.1} parent=1 // loop_footer
      %s19 = sadd.s32 1, %s15
    $region7: #{tpu_custom_call.1} parent=1 // loop_footer_branch
      %14 = sbr.rel target = $region3
    $region8: #{tpu_custom_call.1} parent=1 // loop_exit
      _
    %264 = vsyncpa [#allocation3], 1
    %s265 = scalar_lea.sflag [#allocation3], 1
    %266 = vsyncpa %s265, 1
    %267 = vsyncpa [#allocation4], 1
    %s268 = scalar_lea.sflag [#allocation4], 1
    %269 = vsyncpa %s268, 1
    %270 = vsyncpa [#allocation5], 1
    %s271 = scalar_lea.sflag [#allocation5], 1
    %272 = vsyncpa %s271, 1
    %273 = vsyncpa [#allocation7], 1

</llo_original>
